<compile_context>
chip_gen: v5e
topology: v5e:2x2
jax: 0.10.0
libtpu: 0.0.40
codegen_flags: <defaults>
</compile_context>

<pallas_src>
import jax
import jax.numpy as jnp
from jax.experimental import pallas as pl
from jax.experimental.pallas import tpu as pltpu


HIDDEN_PAD = 128   # hidden_size (40) padded to a full 128-lane vreg width
OUTPUT_PAD = 128   # output_size (18) padded to a full 128-lane vreg width


def rnn_kernel(idx_ref,        # SMEM  (seq_len,) int32    -- scalar-prefetched indices
               emb_ref,        # VMEM  (vocab, input_size) -- embedding table
               h0_ref,         # VMEM  (1, HIDDEN_PAD)     -- initial hidden (padded)
               wih_ref,        # VMEM  (input_size, HIDDEN_PAD)
               brnn_ref,       # VMEM  (1, HIDDEN_PAD)     -- b_ih + b_hh (pre-folded)
               whh_ref,        # VMEM  (HIDDEN_PAD, HIDDEN_PAD)
               wfc_ref,        # VMEM  (HIDDEN_PAD, OUTPUT_PAD)
               bfc_ref,        # VMEM  (1, OUTPUT_PAD)
               out_ref,        # VMEM  (1, OUTPUT_PAD)
               embed_scratch): # VMEM scratch (seq_len, input_size)
    seq_len = embed_scratch.shape[0]

    # ---- in-kernel embedding gather (dynamic row loads from the VMEM table) ----
    for i in range(seq_len):                               # static, fully unrolled
        embed_scratch[pl.ds(i, 1), :] = emb_ref[pl.ds(idx_ref[i], 1), :]

    # ---- hoisted input projection: ONE (seq, in) x (in, hidden) matmul ----------
    x_proj = (jnp.dot(embed_scratch[...], wih_ref[...],
                      preferred_element_type=jnp.float32)
              + brnn_ref[...])                             # (seq_len, HIDDEN_PAD)

    # ---- serial recurrence: only h @ W_hh is on the critical path ---------------
    h = h0_ref[...]                                        # (1, HIDDEN_PAD), lives in vregs
    for i in range(seq_len):                               # static, fully unrolled
        pre = x_proj[i:i + 1, :] + jnp.dot(h, whh_ref[...],
                                           preferred_element_type=jnp.float32)
        h = jnp.tanh(pre)                                  # nn.RNNCell default nonlinearity

    # ---- output head: Linear + Sigmoid (lane-dense 128-wide output) -------------
    logits = jnp.dot(h, wfc_ref[...], preferred_element_type=jnp.float32) + bfc_ref[...]
    out_ref[...] = jax.nn.sigmoid(logits).astype(out_ref.dtype)


def rnn_model_forward(input_idx, hidden, kparams, *, output_size):
    """Runs the whole forward pass in one Pallas call; slices the real outputs."""
    seq_len = input_idx.shape[0]
    vocab, input_size = kparams["embedding"].shape
    hp = kparams["w_hh"].shape[0]          # HIDDEN_PAD
    op = kparams["b_fc"].shape[-1]         # OUTPUT_PAD

    # pad the (1, hidden_size) state to the lane-dense kernel width (one tiny op)
    h0 = jnp.zeros((1, hp), jnp.float32).at[:, :hidden.shape[-1]].set(
        hidden.astype(jnp.float32))

    def full(shape):
        return pl.BlockSpec(shape, lambda i, idx: tuple(0 for _ in shape))

    flops = (2 * seq_len * input_size * hp      # hoisted input projection
             + 2 * seq_len * hp * hp            # recurrence h @ W_hh
             + 2 * hp * op)                     # FC head
    transcendentals = seq_len * hp + op         # tanh + sigmoid
    bytes_accessed = 4 * (vocab * input_size + hp + input_size * hp + hp
                          + hp * hp + hp * op + op + op) + 4 * seq_len

    out = pl.pallas_call(
        rnn_kernel,
        out_shape=jax.ShapeDtypeStruct((1, op), jnp.float32),
        grid_spec=pltpu.PrefetchScalarGridSpec(
            num_scalar_prefetch=1,              # input_idx -> SMEM
            grid=(1,),
            in_specs=[
                full((vocab, input_size)),      # embedding table
                full((1, hp)),                  # h0 (padded)
                full((input_size, hp)),         # W_ih  (pre-transposed, zero-padded)
                full((1, hp)),                  # b_ih + b_hh (folded, zero-padded)
                full((hp, hp)),                 # W_hh
                full((hp, op)),                 # W_fc
                full((1, op)),                  # b_fc
            ],
            out_specs=full((1, op)),
            scratch_shapes=[pltpu.VMEM((seq_len, input_size), jnp.float32)],
        ),
        compiler_params=pltpu.CompilerParams(
            dimension_semantics=("arbitrary",)),
        cost_estimate=pl.CostEstimate(
            flops=flops,
            transcendentals=transcendentals,
            bytes_accessed=bytes_accessed),
    )(
        input_idx.astype(jnp.int32),
        kparams["embedding"],
        h0,
        kparams["w_ih"],
        kparams["b_rnn"],
        kparams["w_hh"],
        kparams["w_fc"],
        kparams["b_fc"],
    )
    return out[:, :output_size]


def init_params(key, vocab_size, input_size, hidden_size, output_size):
    """Logical (unpadded) parameters, PyTorch-like init; weights pre-transposed to (in, out)."""
    ks = jax.random.split(key, 7)

    def u(k, shape, bound):
        return jax.random.uniform(k, shape, jnp.float32, -bound, bound)

    bound = 1.0 / float(hidden_size) ** 0.5
    return {
        "embedding": jax.random.normal(ks[0], (vocab_size, input_size), jnp.float32),
        "w_ih": u(ks[1], (input_size, hidden_size), bound),
        "b_ih": u(ks[2], (1, hidden_size), bound),
        "w_hh": u(ks[3], (hidden_size, hidden_size), bound),
        "b_hh": u(ks[4], (1, hidden_size), bound),
        "w_fc": u(ks[5], (hidden_size, output_size), bound),
        "b_fc": u(ks[6], (1, output_size), bound),
    }


def prepare_kernel_params(params, hidden_pad=HIDDEN_PAD, output_pad=OUTPUT_PAD):
    """One-time: zero-pad hidden/output dims to 128 lanes and fold the two RNN biases.

    Zero padding is mathematically inert: padded bias lanes are 0, padded W_hh rows/cols
    are 0, so padded hidden lanes stay exactly 0 through tanh; padded W_fc rows are 0 so
    they never leak into the real outputs.
    """
    input_size, _ = params["w_ih"].shape

    def padw(w, rows, cols):
        return jnp.zeros((rows, cols), jnp.float32).at[:w.shape[0], :w.shape[1]].set(w)

    return {
        "embedding": params["embedding"].astype(jnp.float32),
        "w_ih": padw(params["w_ih"], input_size, hidden_pad),
        "b_rnn": padw(params["b_ih"] + params["b_hh"], 1, hidden_pad),
        "w_hh": padw(params["w_hh"], hidden_pad, hidden_pad),
        "w_fc": padw(params["w_fc"], hidden_pad, output_pad),
        "b_fc": padw(params["b_fc"], 1, output_pad),
    }


if __name__ == "__main__":
    vocab_size = 57      # ~ len(string.ascii_letters) + punctuation, tutorial-style
    input_size = 30
    hidden_size = 40
    output_size = 18     # number of language categories in the name-classification lesson
    seq_len = 8

    key = jax.random.PRNGKey(0)
    pkey, ikey = jax.random.split(key)
    params = init_params(pkey, vocab_size, input_size, hidden_size, output_size)
    kparams = prepare_kernel_params(params)

    # example name as a sequence of character indices, e.g. 'Cheng' -> [5, 20, ...]
    input_idx = jax.random.randint(ikey, (seq_len,), 0, vocab_size, dtype=jnp.int32)
    hidden0 = jnp.zeros((1, hidden_size), jnp.float32)

    out = rnn_model_forward(input_idx, hidden0, kparams, output_size=output_size)
    jax.block_until_ready(out)

    # lightweight pure-JAX reference of the same math (unpadded params)
    embed = jnp.take(params["embedding"], input_idx, axis=0)
    h = hidden0
    for i in range(seq_len):
        h = jnp.tanh(embed[i:i + 1] @ params["w_ih"] + params["b_ih"]
                     + h @ params["w_hh"] + params["b_hh"])
    ref = jax.nn.sigmoid(h @ params["w_fc"] + params["b_fc"])

    assert out.shape == (1, output_size)
    assert jnp.allclose(out, ref, atol=1e-5), "mismatch vs reference"

    print("KERNEL_OK")
</pallas_src>

<mosaic_0001>
module attributes {stable_mosaic.version = 11 : i64} {
  func.func @rnn_kernel(%arg0: i32, %arg1: memref<8xi32, #tpu.memory_space<smem>>, %arg2: memref<57x30xf32, #tpu.memory_space<vmem>>, %arg3: memref<1x128xf32, #tpu.memory_space<vmem>>, %arg4: memref<30x128xf32, #tpu.memory_space<vmem>>, %arg5: memref<1x128xf32, #tpu.memory_space<vmem>>, %arg6: memref<128x128xf32, #tpu.memory_space<vmem>>, %arg7: memref<128x128xf32, #tpu.memory_space<vmem>>, %arg8: memref<1x128xf32, #tpu.memory_space<vmem>>, %arg9: memref<1x128xf32, #tpu.memory_space<vmem>>, %arg10: memref<8x30xf32, #tpu.memory_space<vmem>>) attributes {dimension_semantics = [#tpu.dimension_semantics<arbitrary>], iteration_bounds = array<i64: 1>, scalar_prefetch = 1 : i64, scratch_operands = 1 : i64, tpu.core_type = #tpu.core_type<tc>, window_params = [{pipeline_mode = #tpu.pipeline_mode<synchronous>, transform_indices = @transform_0, window_bounds = array<i64: 57, 30>}, {pipeline_mode = #tpu.pipeline_mode<synchronous>, transform_indices = @transform_1, window_bounds = array<i64: 1, 128>}, {pipeline_mode = #tpu.pipeline_mode<synchronous>, transform_indices = @transform_2, window_bounds = array<i64: 30, 128>}, {pipeline_mode = #tpu.pipeline_mode<synchronous>, transform_indices = @transform_3, window_bounds = array<i64: 1, 128>}, {pipeline_mode = #tpu.pipeline_mode<synchronous>, transform_indices = @transform_4, window_bounds = array<i64: 128, 128>}, {pipeline_mode = #tpu.pipeline_mode<synchronous>, transform_indices = @transform_5, window_bounds = array<i64: 128, 128>}, {pipeline_mode = #tpu.pipeline_mode<synchronous>, transform_indices = @transform_6, window_bounds = array<i64: 1, 128>}, {pipeline_mode = #tpu.pipeline_mode<synchronous>, transform_indices = @transform_7, window_bounds = array<i64: 1, 128>}]} {
    %c0 = arith.constant 0 : index
    %0 = memref.load %arg1[%c0] : memref<8xi32, #tpu.memory_space<smem>>
    %1 = arith.index_cast %0 : i32 to index
    %c0_0 = arith.constant 0 : index
    %2 = vector.load %arg2[%1, %c0_0] : memref<57x30xf32, #tpu.memory_space<vmem>>, vector<1x30xf32>
    %c0_1 = arith.constant 0 : index
    %c0_2 = arith.constant 0 : index
    %3 = vector.load %arg10[%c0_1, %c0_2] : memref<8x30xf32, #tpu.memory_space<vmem>>, vector<1x30xf32>
    tpu.vector_store %arg10[%c0_1, %c0_2], %2 {strides = array<i32>} : memref<8x30xf32, #tpu.memory_space<vmem>>, vector<1x30xf32>,
    %c1 = arith.constant 1 : index
    %4 = memref.load %arg1[%c1] : memref<8xi32, #tpu.memory_space<smem>>
    %5 = arith.index_cast %4 : i32 to index
    %c0_3 = arith.constant 0 : index
    %6 = vector.load %arg2[%5, %c0_3] : memref<57x30xf32, #tpu.memory_space<vmem>>, vector<1x30xf32>
    %c1_4 = arith.constant 1 : index
    %c0_5 = arith.constant 0 : index
    %7 = vector.load %arg10[%c1_4, %c0_5] : memref<8x30xf32, #tpu.memory_space<vmem>>, vector<1x30xf32>
    tpu.vector_store %arg10[%c1_4, %c0_5], %6 {strides = array<i32>} : memref<8x30xf32, #tpu.memory_space<vmem>>, vector<1x30xf32>,
    %c2 = arith.constant 2 : index
    %8 = memref.load %arg1[%c2] : memref<8xi32, #tpu.memory_space<smem>>
    %9 = arith.index_cast %8 : i32 to index
    %c0_6 = arith.constant 0 : index
    %10 = vector.load %arg2[%9, %c0_6] : memref<57x30xf32, #tpu.memory_space<vmem>>, vector<1x30xf32>
    %c2_7 = arith.constant 2 : index
    %c0_8 = arith.constant 0 : index
    %11 = vector.load %arg10[%c2_7, %c0_8] : memref<8x30xf32, #tpu.memory_space<vmem>>, vector<1x30xf32>
    tpu.vector_store %arg10[%c2_7, %c0_8], %10 {strides = array<i32>} : memref<8x30xf32, #tpu.memory_space<vmem>>, vector<1x30xf32>,
    %c3 = arith.constant 3 : index
    %12 = memref.load %arg1[%c3] : memref<8xi32, #tpu.memory_space<smem>>
    %13 = arith.index_cast %12 : i32 to index
    %c0_9 = arith.constant 0 : index
    %14 = vector.load %arg2[%13, %c0_9] : memref<57x30xf32, #tpu.memory_space<vmem>>, vector<1x30xf32>
    %c3_10 = arith.constant 3 : index
    %c0_11 = arith.constant 0 : index
    %15 = vector.load %arg10[%c3_10, %c0_11] : memref<8x30xf32, #tpu.memory_space<vmem>>, vector<1x30xf32>
    tpu.vector_store %arg10[%c3_10, %c0_11], %14 {strides = array<i32>} : memref<8x30xf32, #tpu.memory_space<vmem>>, vector<1x30xf32>,
    %c4 = arith.constant 4 : index
    %16 = memref.load %arg1[%c4] : memref<8xi32, #tpu.memory_space<smem>>
    %17 = arith.index_cast %16 : i32 to index
    %c0_12 = arith.constant 0 : index
    %18 = vector.load %arg2[%17, %c0_12] : memref<57x30xf32, #tpu.memory_space<vmem>>, vector<1x30xf32>
    %c4_13 = arith.constant 4 : index
    %c0_14 = arith.constant 0 : index
    %19 = vector.load %arg10[%c4_13, %c0_14] : memref<8x30xf32, #tpu.memory_space<vmem>>, vector<1x30xf32>
    tpu.vector_store %arg10[%c4_13, %c0_14], %18 {strides = array<i32>} : memref<8x30xf32, #tpu.memory_space<vmem>>, vector<1x30xf32>,
    %c5 = arith.constant 5 : index
    %20 = memref.load %arg1[%c5] : memref<8xi32, #tpu.memory_space<smem>>
    %21 = arith.index_cast %20 : i32 to index
    %c0_15 = arith.constant 0 : index
    %22 = vector.load %arg2[%21, %c0_15] : memref<57x30xf32, #tpu.memory_space<vmem>>, vector<1x30xf32>
    %c5_16 = arith.constant 5 : index
    %c0_17 = arith.constant 0 : index
    %23 = vector.load %arg10[%c5_16, %c0_17] : memref<8x30xf32, #tpu.memory_space<vmem>>, vector<1x30xf32>
    tpu.vector_store %arg10[%c5_16, %c0_17], %22 {strides = array<i32>} : memref<8x30xf32, #tpu.memory_space<vmem>>, vector<1x30xf32>,
    %c6 = arith.constant 6 : index
    %24 = memref.load %arg1[%c6] : memref<8xi32, #tpu.memory_space<smem>>
    %25 = arith.index_cast %24 : i32 to index
    %c0_18 = arith.constant 0 : index
    %26 = vector.load %arg2[%25, %c0_18] : memref<57x30xf32, #tpu.memory_space<vmem>>, vector<1x30xf32>
    %c6_19 = arith.constant 6 : index
    %c0_20 = arith.constant 0 : index
    %27 = vector.load %arg10[%c6_19, %c0_20] : memref<8x30xf32, #tpu.memory_space<vmem>>, vector<1x30xf32>
    tpu.vector_store %arg10[%c6_19, %c0_20], %26 {strides = array<i32>} : memref<8x30xf32, #tpu.memory_space<vmem>>, vector<1x30xf32>,
    %c7 = arith.constant 7 : index
    %28 = memref.load %arg1[%c7] : memref<8xi32, #tpu.memory_space<smem>>
    %29 = arith.index_cast %28 : i32 to index
    %c0_21 = arith.constant 0 : index
    %30 = vector.load %arg2[%29, %c0_21] : memref<57x30xf32, #tpu.memory_space<vmem>>, vector<1x30xf32>
    %c7_22 = arith.constant 7 : index
    %c0_23 = arith.constant 0 : index
    %31 = vector.load %arg10[%c7_22, %c0_23] : memref<8x30xf32, #tpu.memory_space<vmem>>, vector<1x30xf32>
    tpu.vector_store %arg10[%c7_22, %c0_23], %30 {strides = array<i32>} : memref<8x30xf32, #tpu.memory_space<vmem>>, vector<1x30xf32>,
    %c0_24 = arith.constant 0 : index
    %c0_25 = arith.constant 0 : index
    %32 = vector.load %arg10[%c0_24, %c0_25] : memref<8x30xf32, #tpu.memory_space<vmem>>, vector<8x30xf32>
    %c0_26 = arith.constant 0 : index
    %c0_27 = arith.constant 0 : index
    %33 = vector.load %arg4[%c0_26, %c0_27] : memref<30x128xf32, #tpu.memory_space<vmem>>, vector<30x128xf32>
    %cst = arith.constant dense<0.000000e+00> : vector<8x128xf32>
    %34 = tpu.matmul %32, %33, %cst {dimension_numbers = #tpu.dot_dimension_numbers<[1], [0], [0], [1], [0, 0, 1, 1], [], []>} : vector<8x30xf32>, vector<30x128xf32>, vector<8x128xf32> -> vector<8x128xf32>
    %c0_28 = arith.constant 0 : index
    %c0_29 = arith.constant 0 : index
    %35 = vector.load %arg5[%c0_28, %c0_29] : memref<1x128xf32, #tpu.memory_space<vmem>>, vector<1x128xf32>
    %36 = vector.broadcast %35 : vector<1x128xf32> to vector<8x128xf32>
    %37 = arith.addf %34, %36 : vector<8x128xf32>
    %c0_30 = arith.constant 0 : index
    %c0_31 = arith.constant 0 : index
    %38 = vector.load %arg3[%c0_30, %c0_31] : memref<1x128xf32, #tpu.memory_space<vmem>>, vector<1x128xf32>
    %39 = vector.extract_strided_slice %37 {offsets = [0, 0], sizes = [1, 128], strides = [1, 1]} : vector<8x128xf32> to vector<1x128xf32>
    %c0_32 = arith.constant 0 : index
    %c0_33 = arith.constant 0 : index
    %40 = vector.load %arg6[%c0_32, %c0_33] : memref<128x128xf32, #tpu.memory_space<vmem>>, vector<128x128xf32>
    %cst_34 = arith.constant dense<0.000000e+00> : vector<1x128xf32>
    %41 = tpu.matmul %38, %40, %cst_34 {dimension_numbers = #tpu.dot_dimension_numbers<[1], [0], [0], [1], [0, 0, 1, 1], [], []>} : vector<1x128xf32>, vector<128x128xf32>, vector<1x128xf32> -> vector<1x128xf32>
    %42 = arith.addf %39, %41 : vector<1x128xf32>
    %43 = math.tanh %42 : vector<1x128xf32>
    %44 = vector.extract_strided_slice %37 {offsets = [1, 0], sizes = [1, 128], strides = [1, 1]} : vector<8x128xf32> to vector<1x128xf32>
    %c0_35 = arith.constant 0 : index
    %c0_36 = arith.constant 0 : index
    %45 = vector.load %arg6[%c0_35, %c0_36] : memref<128x128xf32, #tpu.memory_space<vmem>>, vector<128x128xf32>
    %cst_37 = arith.constant dense<0.000000e+00> : vector<1x128xf32>
    %46 = tpu.matmul %43, %45, %cst_37 {dimension_numbers = #tpu.dot_dimension_numbers<[1], [0], [0], [1], [0, 0, 1, 1], [], []>} : vector<1x128xf32>, vector<128x128xf32>, vector<1x128xf32> -> vector<1x128xf32>
    %47 = arith.addf %44, %46 : vector<1x128xf32>
    %48 = math.tanh %47 : vector<1x128xf32>
    %49 = vector.extract_strided_slice %37 {offsets = [2, 0], sizes = [1, 128], strides = [1, 1]} : vector<8x128xf32> to vector<1x128xf32>
    %c0_38 = arith.constant 0 : index
    %c0_39 = arith.constant 0 : index
    %50 = vector.load %arg6[%c0_38, %c0_39] : memref<128x128xf32, #tpu.memory_space<vmem>>, vector<128x128xf32>
    %cst_40 = arith.constant dense<0.000000e+00> : vector<1x128xf32>
    %51 = tpu.matmul %48, %50, %cst_40 {dimension_numbers = #tpu.dot_dimension_numbers<[1], [0], [0], [1], [0, 0, 1, 1], [], []>} : vector<1x128xf32>, vector<128x128xf32>, vector<1x128xf32> -> vector<1x128xf32>
    %52 = arith.addf %49, %51 : vector<1x128xf32>
    %53 = math.tanh %52 : vector<1x128xf32>
    %54 = vector.extract_strided_slice %37 {offsets = [3, 0], sizes = [1, 128], strides = [1, 1]} : vector<8x128xf32> to vector<1x128xf32>
    %c0_41 = arith.constant 0 : index
    %c0_42 = arith.constant 0 : index
    %55 = vector.load %arg6[%c0_41, %c0_42] : memref<128x128xf32, #tpu.memory_space<vmem>>, vector<128x128xf32>
    %cst_43 = arith.constant dense<0.000000e+00> : vector<1x128xf32>
    %56 = tpu.matmul %53, %55, %cst_43 {dimension_numbers = #tpu.dot_dimension_numbers<[1], [0], [0], [1], [0, 0, 1, 1], [], []>} : vector<1x128xf32>, vector<128x128xf32>, vector<1x128xf32> -> vector<1x128xf32>
    %57 = arith.addf %54, %56 : vector<1x128xf32>
    %58 = math.tanh %57 : vector<1x128xf32>
    %59 = vector.extract_strided_slice %37 {offsets = [4, 0], sizes = [1, 128], strides = [1, 1]} : vector<8x128xf32> to vector<1x128xf32>
    %c0_44 = arith.constant 0 : index
    %c0_45 = arith.constant 0 : index
    %60 = vector.load %arg6[%c0_44, %c0_45] : memref<128x128xf32, #tpu.memory_space<vmem>>, vector<128x128xf32>
    %cst_46 = arith.constant dense<0.000000e+00> : vector<1x128xf32>
    %61 = tpu.matmul %58, %60, %cst_46 {dimension_numbers = #tpu.dot_dimension_numbers<[1], [0], [0], [1], [0, 0, 1, 1], [], []>} : vector<1x128xf32>, vector<128x128xf32>, vector<1x128xf32> -> vector<1x128xf32>
    %62 = arith.addf %59, %61 : vector<1x128xf32>
    %63 = math.tanh %62 : vector<1x128xf32>
    %64 = vector.extract_strided_slice %37 {offsets = [5, 0], sizes = [1, 128], strides = [1, 1]} : vector<8x128xf32> to vector<1x128xf32>
    %c0_47 = arith.constant 0 : index
    %c0_48 = arith.constant 0 : index
    %65 = vector.load %arg6[%c0_47, %c0_48] : memref<128x128xf32, #tpu.memory_space<vmem>>, vector<128x128xf32>
    %cst_49 = arith.constant dense<0.000000e+00> : vector<1x128xf32>
    %66 = tpu.matmul %63, %65, %cst_49 {dimension_numbers = #tpu.dot_dimension_numbers<[1], [0], [0], [1], [0, 0, 1, 1], [], []>} : vector<1x128xf32>, vector<128x128xf32>, vector<1x128xf32> -> vector<1x128xf32>
    %67 = arith.addf %64, %66 : vector<1x128xf32>
    %68 = math.tanh %67 : vector<1x128xf32>
    %69 = vector.extract_strided_slice %37 {offsets = [6, 0], sizes = [1, 128], strides = [1, 1]} : vector<8x128xf32> to vector<1x128xf32>
    %c0_50 = arith.constant 0 : index
    %c0_51 = arith.constant 0 : index
    %70 = vector.load %arg6[%c0_50, %c0_51] : memref<128x128xf32, #tpu.memory_space<vmem>>, vector<128x128xf32>
    %cst_52 = arith.constant dense<0.000000e+00> : vector<1x128xf32>
    %71 = tpu.matmul %68, %70, %cst_52 {dimension_numbers = #tpu.dot_dimension_numbers<[1], [0], [0], [1], [0, 0, 1, 1], [], []>} : vector<1x128xf32>, vector<128x128xf32>, vector<1x128xf32> -> vector<1x128xf32>
    %72 = arith.addf %69, %71 : vector<1x128xf32>
    %73 = math.tanh %72 : vector<1x128xf32>
    %74 = vector.extract_strided_slice %37 {offsets = [7, 0], sizes = [1, 128], strides = [1, 1]} : vector<8x128xf32> to vector<1x128xf32>
    %c0_53 = arith.constant 0 : index
    %c0_54 = arith.constant 0 : index
    %75 = vector.load %arg6[%c0_53, %c0_54] : memref<128x128xf32, #tpu.memory_space<vmem>>, vector<128x128xf32>
    %cst_55 = arith.constant dense<0.000000e+00> : vector<1x128xf32>
    %76 = tpu.matmul %73, %75, %cst_55 {dimension_numbers = #tpu.dot_dimension_numbers<[1], [0], [0], [1], [0, 0, 1, 1], [], []>} : vector<1x128xf32>, vector<128x128xf32>, vector<1x128xf32> -> vector<1x128xf32>
    %77 = arith.addf %74, %76 : vector<1x128xf32>
    %78 = math.tanh %77 : vector<1x128xf32>
    %c0_56 = arith.constant 0 : index
    %c0_57 = arith.constant 0 : index
    %79 = vector.load %arg7[%c0_56, %c0_57] : memref<128x128xf32, #tpu.memory_space<vmem>>, vector<128x128xf32>
    %cst_58 = arith.constant dense<0.000000e+00> : vector<1x128xf32>
    %80 = tpu.matmul %78, %79, %cst_58 {dimension_numbers = #tpu.dot_dimension_numbers<[1], [0], [0], [1], [0, 0, 1, 1], [], []>} : vector<1x128xf32>, vector<128x128xf32>, vector<1x128xf32> -> vector<1x128xf32>
    %c0_59 = arith.constant 0 : index
    %c0_60 = arith.constant 0 : index
    %81 = vector.load %arg8[%c0_59, %c0_60] : memref<1x128xf32, #tpu.memory_space<vmem>>, vector<1x128xf32>
    %82 = arith.addf %80, %81 : vector<1x128xf32>
    %83 = arith.negf %82 : vector<1x128xf32>
    %84 = math.exp %83 : vector<1x128xf32>
    %cst_61 = arith.constant 1.000000e+00 : f32
    %85 = vector.broadcast %cst_61 : f32 to vector<1x128xf32>
    %86 = arith.addf %85, %84 : vector<1x128xf32>
    %87 = arith.divf %85, %86 : vector<1x128xf32>
    %c0_62 = arith.constant 0 : index
    %c0_63 = arith.constant 0 : index
    %88 = vector.load %arg9[%c0_62, %c0_63] : memref<1x128xf32, #tpu.memory_space<vmem>>, vector<1x128xf32>
    tpu.vector_store %arg9[%c0_62, %c0_63], %87 {strides = array<i32>} : memref<1x128xf32, #tpu.memory_space<vmem>>, vector<1x128xf32>,
    return
  }
  func.func @transform_0(%arg0: i32, %arg1: memref<8xi32, #tpu.memory_space<smem>>) -> (i32, i32) {
    %c0_i32 = arith.constant 0 : i32
    %c0_i32_0 = arith.constant 0 : i32
    %c0_i32_1 = arith.constant 0 : i32
    return %c0_i32, %c0_i32_0 : i32, i32
  }
  func.func @transform_1(%arg0: i32, %arg1: memref<8xi32, #tpu.memory_space<smem>>) -> (i32, i32) {
    %c0_i32 = arith.constant 0 : i32
    %c0_i32_0 = arith.constant 0 : i32
    %c0_i32_1 = arith.constant 0 : i32
    return %c0_i32, %c0_i32_0 : i32, i32
  }
  func.func @transform_2(%arg0: i32, %arg1: memref<8xi32, #tpu.memory_space<smem>>) -> (i32, i32) {
    %c0_i32 = arith.constant 0 : i32
    %c0_i32_0 = arith.constant 0 : i32
    %c0_i32_1 = arith.constant 0 : i32
    return %c0_i32, %c0_i32_0 : i32, i32
  }
  func.func @transform_3(%arg0: i32, %arg1: memref<8xi32, #tpu.memory_space<smem>>) -> (i32, i32) {
    %c0_i32 = arith.constant 0 : i32
    %c0_i32_0 = arith.constant 0 : i32
    %c0_i32_1 = arith.constant 0 : i32
    return %c0_i32, %c0_i32_0 : i32, i32
  }
  func.func @transform_4(%arg0: i32, %arg1: memref<8xi32, #tpu.memory_space<smem>>) -> (i32, i32) {
    %c0_i32 = arith.constant 0 : i32
    %c0_i32_0 = arith.constant 0 : i32
    %c0_i32_1 = arith.constant 0 : i32
    return %c0_i32, %c0_i32_0 : i32, i32
  }
  func.func @transform_5(%arg0: i32, %arg1: memref<8xi32, #tpu.memory_space<smem>>) -> (i32, i32) {
    %c0_i32 = arith.constant 0 : i32
    %c0_i32_0 = arith.constant 0 : i32
    %c0_i32_1 = arith.constant 0 : i32
    return %c0_i32, %c0_i32_0 : i32, i32
  }
  func.func @transform_6(%arg0: i32, %arg1: memref<8xi32, #tpu.memory_space<smem>>) -> (i32, i32) {
    %c0_i32 = arith.constant 0 : i32
    %c0_i32_0 = arith.constant 0 : i32
    %c0_i32_1 = arith.constant 0 : i32
    return %c0_i32, %c0_i32_0 : i32, i32
  }
  func.func @transform_7(%arg0: i32, %arg1: memref<8xi32, #tpu.memory_space<smem>>) -> (i32, i32) {
    %c0_i32 = arith.constant 0 : i32
    %c0_i32_0 = arith.constant 0 : i32
    %c0_i32_1 = arith.constant 0 : i32
    return %c0_i32, %c0_i32_0 : i32, i32
  }
}

</mosaic_0001>

<llo_original>
// kernel: tpu_custom_call.1
$region0: #{tpu_custom_call.1}
  #allocation0 [shape = 'u32[]', space=smem, size = 0x4, offset = 0x4, fixed_abs, tag = 'smem constant byte address 0x4 - core index']
  #allocation1 [shape = 'u32[72,128]{1,0:T(1,128)}', space=vmem, size = 0x9000, scoped, tag = 'internal scratch']
  #allocation2 [shape = 'f32[8,30]{1,0:T(8,128)}', space=vmem, size = 0x1000, scoped, tag = 'scratch operand']
  #allocation3 [shape = 's32[1]{0}', space=sflag, size = 0x4, scoped, tag = 'scoped memory for tpu_custom_call.1']
  #allocation4 [shape = 'u8[512]{0}', space=smem, size = 0x200, scoped, tag = 'prefetched SMEM operand 0']
  %s0 = inlined_call_operand.vmem [shape: s32[8], index: 0, kind: input, shape index: {}]
  %s1 = inlined_call_operand.vmem [shape: f32[57,30], index: 1, kind: input, shape index: {}]
  %s2 = inlined_call_operand.vmem [shape: f32[1,128], index: 2, kind: input, shape index: {}]
  %s3 = inlined_call_operand.vmem [shape: f32[30,128], index: 3, kind: input, shape index: {}]
  %s4 = inlined_call_operand.vmem [shape: f32[1,128], index: 4, kind: input, shape index: {}]
  %s5 = inlined_call_operand.hbm [shape: f32[128,128], index: 5, kind: input, shape index: {}]
  %s6 = inlined_call_operand.hbm [shape: f32[128,128], index: 6, kind: input, shape index: {}]
  %s7 = inlined_call_operand.vmem [shape: f32[1,128], index: 7, kind: input, shape index: {}]
  %s8 = inlined_call_operand.hbm [shape: f32[1,128], index: 8, kind: output, shape index: {}]
  %s9 = sld [smem:[#allocation0]]
  $region46: #{tpu_custom_call.1} parent=0
    _
  %s11 = ssub.s32 1, %s9
  %s12 = scalar_select 0, %s11, %s9
  %s14 = sshll.u32 %s0, 4
  %s15 = int_to_ptr.vmem [resolvable:$true] %s14
  %17 = dma.vmem_to_smem %s15, 16, [#allocation4], [#allocation3]
  %19 = dma.done [#allocation3], 16
  %20 = sfence
  $region1: #{tpu_custom_call.1} parent=0
    #allocation5 [shape = 'u8[65536]{0}', space=vmem, size = 0x10000, scoped, tag = 'input window, operand 5, single buffered']
    #allocation6 [shape = 's32[1]{0}', space=sflag, size = 0x4, scoped, tag = 'scoped memory for tpu_custom_call.1']
    #allocation7 [shape = 's32[1]{0}', space=sflag, size = 0x4, scoped, tag = 'scoped memory for tpu_custom_call.1']
    #allocation8 [shape = 'u8[65536]{0}', space=vmem, size = 0x10000, scoped, tag = 'input window, operand 6, single buffered']
    #allocation9 [shape = 's32[1]{0}', space=sflag, size = 0x4, scoped, tag = 'scoped memory for tpu_custom_call.1']
    #allocation10 [shape = 'u8[512]{0}', space=vmem, size = 0x400, scoped, tag = 'output window, operand 0, single buffered']
    %21 = vsyncpa [#allocation6], 0
    %22 = vsyncpa [#allocation9], 0
    %23 = vsyncpa [#allocation7], 0
    // Predicated region
    $region2: #{tpu_custom_call.1} parent=1 // pred_check
      _
    $region3: #{tpu_custom_call.1} parent=1 // pred_check_branch
      %25 = sbr.rel (0) target = $region5
    $region4: #{tpu_custom_call.1} parent=1 // pred_region
      _
    $region5: #{tpu_custom_call.1} parent=1 // pred_fallthru
      _
    // Predicated region
    $region6: #{tpu_custom_call.1} parent=1 // pred_check
      _
    $region7: #{tpu_custom_call.1} parent=1 // pred_check_branch
      %27 = sbr.rel (0) target = $region9
    $region8: #{tpu_custom_call.1} parent=1 // pred_region
      _
    $region9: #{tpu_custom_call.1} parent=1 // pred_fallthru
      _
    // Predicated region
    $region10: #{tpu_custom_call.1} parent=1 // pred_check
      _
    $region11: #{tpu_custom_call.1} parent=1 // pred_check_branch
      %29 = sbr.rel (0) target = $region13
    $region12: #{tpu_custom_call.1} parent=1 // pred_region
      _
    $region13: #{tpu_custom_call.1} parent=1 // pred_fallthru
      _
    // Predicated region
    $region14: #{tpu_custom_call.1} parent=1 // pred_check
      _
    $region15: #{tpu_custom_call.1} parent=1 // pred_check_branch
      %31 = sbr.rel (0) target = $region17
    $region16: #{tpu_custom_call.1} parent=1 // pred_region
      _
    $region17: #{tpu_custom_call.1} parent=1 // pred_fallthru
      _
    // Predicated region
    $region18: #{tpu_custom_call.1} parent=1 // pred_check
      _
    $region19: #{tpu_custom_call.1} parent=1 // pred_check_branch
      %33 = sbr.rel (0) target = $region21
    $region20: #{tpu_custom_call.1} parent=1 // pred_region
      %35 = vsyncadd [#allocation6], 0
      %s36 = sshll.u32 %s5, 4
      %s37 = int_to_ptr.hbm [resolvable:$true] %s36
      %s38 = sshll.u32 [#allocation5], 4
      %s39 = int_to_ptr.vmem [resolvable:$true] %s38
      %44 = dma.hbm_to_vmem [thread:$0]  %s37, 2048, %s39, [#allocation6], 128, 128, 8
    $region21: #{tpu_custom_call.1} parent=1 // pred_fallthru
      _
    // Predicated region
    $region22: #{tpu_custom_call.1} parent=1 // pred_check
      _
    $region23: #{tpu_custom_call.1} parent=1 // pred_check_branch
      %46 = sbr.rel (0) target = $region25
    $region24: #{tpu_custom_call.1} parent=1 // pred_region
      %48 = vsyncadd [#allocation9], 0
      %s49 = sshll.u32 %s6, 4
      %s50 = int_to_ptr.hbm [resolvable:$true] %s49
      %s51 = sshll.u32 [#allocation8], 4
      %s52 = int_to_ptr.vmem [resolvable:$true] %s51
      %57 = dma.hbm_to_vmem [thread:$0]  %s50, 2048, %s52, [#allocation9], 128, 128, 8
    $region25: #{tpu_custom_call.1} parent=1 // pred_fallthru
      _
    // Predicated region
    $region26: #{tpu_custom_call.1} parent=1 // pred_check
      _
    $region27: #{tpu_custom_call.1} parent=1 // pred_check_branch
      %59 = sbr.rel (0) target = $region29
    $region28: #{tpu_custom_call.1} parent=1 // pred_region
      _
    $region29: #{tpu_custom_call.1} parent=1 // pred_fallthru
      _
    // Predicated region
    $region30: #{tpu_custom_call.1} parent=1 // pred_check
      _
    $region31: #{tpu_custom_call.1} parent=1 // pred_check_branch
      %61 = sbr.rel (0) target = $region33
    $region32: #{tpu_custom_call.1} parent=1 // pred_region
      %63 = dma.done [#allocation6], 2048
    $region33: #{tpu_custom_call.1} parent=1 // pred_fallthru
      _
    // Predicated region
    $region34: #{tpu_custom_call.1} parent=1 // pred_check
      _
    $region35: #{tpu_custom_call.1} parent=1 // pred_check_branch
      %65 = sbr.rel (0) target = $region37
    $region36: #{tpu_custom_call.1} parent=1 // pred_region
      %67 = dma.done [#allocation9], 2048
    $region37: #{tpu_custom_call.1} parent=1 // pred_fallthru
      _
    %s68 = sld [smem:[#allocation4]]
    %s69 = scalar_lea.vmem %s1, %s68
    %v70 = vld [vmem:[%s69] sm:$0x1]
    %vm71 = vcmask 237568
    %72 = vst.msk [vmem:[#allocation2] sm:$0x1] %vm71, %v70
    %s73 = sld [smem:[#allocation4 + $0x1]]
    %s74 = scalar_lea.vmem %s1, %s73
    %v75 = vld [vmem:[%s74] sm:$0x1]
    %76 = vst.msk [vmem:[#allocation2 + $0x1] sm:$0x1] %vm71, %v75
    %s77 = sld [smem:[#allocation4 + $0x2]]
    %s78 = scalar_lea.vmem %s1, %s77
    %v79 = vld [vmem:[%s78] sm:$0x1]
    %80 = vst.msk [vmem:[#allocation2 + $0x2] sm:$0x1] %vm71, %v79
    %s81 = sld [smem:[#allocation4 + $0x3]]
    %s82 = scalar_lea.vmem %s1, %s81
    %v83 = vld [vmem:[%s82] sm:$0x1]
    %84 = vst.msk [vmem:[#allocation2 + $0x3] sm:$0x1] %vm71, %v83
    %s85 = sld [smem:[#allocation4 + $0x4]]
    %s86 = scalar_lea.vmem %s1, %s85
    %v87 = vld [vmem:[%s86] sm:$0x1]
    %88 = vst.msk [vmem:[#allocation2 + $0x4] sm:$0x1] %vm71, %v87
    %s89 = sld [smem:[#allocation4 + $0x5]]
    %s90 = scalar_lea.vmem %s1, %s89
    %v91 = vld [vmem:[%s90] sm:$0x1]
    %92 = vst.msk [vmem:[#allocation2 + $0x5] sm:$0x1] %vm71, %v91
    %s93 = sld [smem:[#allocation4 + $0x6]]
    %s94 = scalar_lea.vmem %s1, %s93
    %v95 = vld [vmem:[%s94] sm:$0x1]
    %96 = vst.msk [vmem:[#allocation2 + $0x6] sm:$0x1] %vm71, %v95
    %s97 = sld [smem:[#allocation4 + $0x7]]
    %s98 = scalar_lea.vmem %s1, %s97
    %v99 = vld [vmem:[%s98] sm:$0x1]
    %100 = vst.msk [vmem:[#allocation2 + $0x7] sm:$0x1] %vm71, %v99
    %v101 = vld [vmem:[#allocation2] sm:$0xff]
    %v102 = vld [vmem:[%s3] sm:$0xff]
    %v103 = vld [vmem:[%s3 + $0x8] sm:$0xff]
    %v104 = vld [vmem:[%s3 + $0x10] sm:$0xff]
    %v105 = vld [vmem:[%s3 + $0x18] sm:$0x3f]
    %v106 = vld [vmem:[%s4] sm:$0x1]
    %v108 = vperm.slane %v106, 0
    %vm110 = vcmask 244736
    %v112 = vsel %vm110, %v101, 0
    %vm114 = vcmask 1045504
    %v116 = vsel %vm114, %v105, 0
    %118 = vmatpush.msra.mxu0 0.0
    %119 = vmatpush.msra.mxu0 0.0
    %120 = vmatpush.msra.mxu0 0.0
    %121 = vmatpush.msra.mxu0 0.0
    %122 = vmatpush.msra.mxu0 0.0
    %123 = vmatpush.msra.mxu0 0.0
    %124 = vmatpush.msra.mxu0 0.0
    %125 = vmatpush.msra.mxu0 0.0
    %126 = vmatpush.msra.mxu0 0.0
    %127 = vmatpush.msra.mxu0 0.0
    %128 = vmatpush.msra.mxu0 0.0
    %129 = vmatpush.msra.mxu0 0.0
    %130 = vmatpush.msra.mxu0 %v116
    %131 = vmatpush.msra.mxu0 %v104
    %132 = vmatpush.msra.mxu0 %v103
    %133 = vmatpush.msra.mxu0 %v102
    %134 = vmatmul.f32.gmra.mxu0 %v112
    %v135 = vpop.f32.mrf.mxu0
    %v136 = vadd.f32 %v108, %v135
    %137 = vdwg.mxu0
    %v138 = vld [vmem:[%s2] sm:$0x1]
    %v139 = vld [vmem:[#allocation5] sm:$0xff]
    %v140 = vld [vmem:[#allocation5 + $0x8] sm:$0xff]
    %v141 = vld [vmem:[#allocation5 + $0x10] sm:$0xff]
    %v142 = vld [vmem:[#allocation5 + $0x18] sm:$0xff]
    %v143 = vld [vmem:[#allocation5 + $0x20] sm:$0xff]
    %v144 = vld [vmem:[#allocation5 + $0x28] sm:$0xff]
    %v145 = vld [vmem:[#allocation5 + $0x30] sm:$0xff]
    %v146 = vld [vmem:[#allocation5 + $0x38] sm:$0xff]
    %v147 = vld [vmem:[#allocation5 + $0x40] sm:$0xff]
    %v148 = vld [vmem:[#allocation5 + $0x48] sm:$0xff]
    %v149 = vld [vmem:[#allocation5 + $0x50] sm:$0xff]
    %v150 = vld [vmem:[#allocation5 + $0x58] sm:$0xff]
    %v151 = vld [vmem:[#allocation5 + $0x60] sm:$0xff]
    %v152 = vld [vmem:[#allocation5 + $0x68] sm:$0xff]
    %v153 = vld [vmem:[#allocation5 + $0x70] sm:$0xff]
    %v154 = vld [vmem:[#allocation5 + $0x78] sm:$0xff]
    %155 = vmatpush.msra.mxu0 %v154
    %156 = vmatpush.msra.mxu0 %v153
    %157 = vmatpush.msra.mxu0 %v152
    %158 = vmatpush.msra.mxu0 %v151
    %159 = vmatpush.msra.mxu0 %v150
    %160 = vmatpush.msra.mxu0 %v149
    %161 = vmatpush.msra.mxu0 %v148
    %162 = vmatpush.msra.mxu0 %v147
    %163 = vmatpush.msra.mxu0 %v146
    %164 = vmatpush.msra.mxu0 %v145
    %165 = vmatpush.msra.mxu0 %v144
    %166 = vmatpush.msra.mxu0 %v143
    %167 = vmatpush.msra.mxu0 %v142
    %168 = vmatpush.msra.mxu0 %v141
    %169 = vmatpush.msra.mxu0 %v140
    %170 = vmatpush.msra.mxu0 %v139
    %171 = vmatmul.f32.gmra.mxu0 %v138
    %v172 = vpop.f32.mrf.mxu0
    %v173 = vadd.f32 0.0, %v172
    %174 = vdwg.mxu0
    %v175 = vadd.f32 %v136, %v173
    %v176 = vtanh.pop %v175
    %177 = vmatpush.msra.mxu0 %v154
    %178 = vmatpush.msra.mxu0 %v153
    %179 = vmatpush.msra.mxu0 %v152
    %180 = vmatpush.msra.mxu0 %v151
    %181 = vmatpush.msra.mxu0 %v150
    %182 = vmatpush.msra.mxu0 %v149
    %183 = vmatpush.msra.mxu0 %v148
    %184 = vmatpush.msra.mxu0 %v147
    %185 = vmatpush.msra.mxu0 %v146
    %186 = vmatpush.msra.mxu0 %v145
    %187 = vmatpush.msra.mxu0 %v144
    %188 = vmatpush.msra.mxu0 %v143
    %189 = vmatpush.msra.mxu0 %v142
    %190 = vmatpush.msra.mxu0 %v141
    %191 = vmatpush.msra.mxu0 %v140
    %192 = vmatpush.msra.mxu0 %v139
    %193 = vmatmul.f32.gmra.mxu0 %v176
    %v194 = vpop.f32.mrf.mxu0
    %v195 = vadd.f32 0.0, %v194
    %196 = vdwg.mxu0
    %v198 = vrot.slane %v195, 7
    %v200 = vadd.f32 %v136, %v198
    %v201 = vtanh.pop %v200
    %v203 = vrot.slane %v201, 1
    %205 = vmatpush.msra.mxu0 %v154
    %206 = vmatpush.msra.mxu0 %v153
    %207 = vmatpush.msra.mxu0 %v152
    %208 = vmatpush.msra.mxu0 %v151
    %209 = vmatpush.msra.mxu0 %v150
    %210 = vmatpush.msra.mxu0 %v149
    %211 = vmatpush.msra.mxu0 %v148
    %212 = vmatpush.msra.mxu0 %v147
    %213 = vmatpush.msra.mxu0 %v146
    %214 = vmatpush.msra.mxu0 %v145
    %215 = vmatpush.msra.mxu0 %v144
    %216 = vmatpush.msra.mxu0 %v143
    %217 = vmatpush.msra.mxu0 %v142
    %218 = vmatpush.msra.mxu0 %v141
    %219 = vmatpush.msra.mxu0 %v140
    %220 = vmatpush.msra.mxu0 %v139
    %221 = vmatmul.f32.gmra.mxu0 %v203
    %v222 = vpop.f32.mrf.mxu0
    %v223 = vadd.f32 0.0, %v222
    %224 = vdwg.mxu0
    %v226 = vrot.slane %v223, 6
    %v228 = vadd.f32 %v136, %v226
    %v229 = vtanh.pop %v228
    %v231 = vrot.slane %v229, 2
    %233 = vmatpush.msra.mxu0 %v154
    %234 = vmatpush.msra.mxu0 %v153
    %235 = vmatpush.msra.mxu0 %v152
    %236 = vmatpush.msra.mxu0 %v151
    %237 = vmatpush.msra.mxu0 %v150
    %238 = vmatpush.msra.mxu0 %v149
    %239 = vmatpush.msra.mxu0 %v148
    %240 = vmatpush.msra.mxu0 %v147
    %241 = vmatpush.msra.mxu0 %v146
    %242 = vmatpush.msra.mxu0 %v145
    %243 = vmatpush.msra.mxu0 %v144
    %244 = vmatpush.msra.mxu0 %v143
    %245 = vmatpush.msra.mxu0 %v142
    %246 = vmatpush.msra.mxu0 %v141
    %247 = vmatpush.msra.mxu0 %v140
    %248 = vmatpush.msra.mxu0 %v139
    %249 = vmatmul.f32.gmra.mxu0 %v231
    %v250 = vpop.f32.mrf.mxu0
    %v251 = vadd.f32 0.0, %v250
    %252 = vdwg.mxu0
    %v254 = vrot.slane %v251, 5
    %v256 = vadd.f32 %v136, %v254
    %v257 = vtanh.pop %v256
    %v259 = vrot.slane %v257, 3
    %261 = vmatpush.msra.mxu0 %v154
    %262 = vmatpush.msra.mxu0 %v153
    %263 = vmatpush.msra.mxu0 %v152
    %264 = vmatpush.msra.mxu0 %v151
    %265 = vmatpush.msra.mxu0 %v150
    %266 = vmatpush.msra.mxu0 %v149
    %267 = vmatpush.msra.mxu0 %v148
    %268 = vmatpush.msra.mxu0 %v147
    %269 = vmatpush.msra.mxu0 %v146
    %270 = vmatpush.msra.mxu0 %v145
    %271 = vmatpush.msra.mxu0 %v144
    %272 = vmatpush.msra.mxu0 %v143
    %273 = vmatpush.msra.mxu0 %v142
    %274 = vmatpush.msra.mxu0 %v141
    %275 = vmatpush.msra.mxu0 %v140
    %276 = vmatpush.msra.mxu0 %v139
    %277 = vmatmul.f32.gmra.mxu0 %v259
    %v278 = vpop.f32.mrf.mxu0
    %v279 = vadd.f32 0.0, %v278
    %280 = vdwg.mxu0
    %v282 = vrot.slane %v279, 4
    %v284 = vadd.f32 %v136, %v282
    %v285 = vtanh.pop %v284
    %v287 = vrot.slane %v285, 4
    %289 = vmatpush.msra.mxu0 %v154
    %290 = vmatpush.msra.mxu0 %v153
    %291 = vmatpush.msra.mxu0 %v152
    %292 = vmatpush.msra.mxu0 %v151
    %293 = vmatpush.msra.mxu0 %v150
    %294 = vmatpush.msra.mxu0 %v149
    %295 = vmatpush.msra.mxu0 %v148
    %296 = vmatpush.msra.mxu0 %v147
    %297 = vmatpush.msra.mxu0 %v146
    %298 = vmatpush.msra.mxu0 %v145
    %299 = vmatpush.msra.mxu0 %v144
    %300 = vmatpush.msra.mxu0 %v143
    %301 = vmatpush.msra.mxu0 %v142
    %302 = vmatpush.msra.mxu0 %v141
    %303 = vmatpush.msra.mxu0 %v140
    %304 = vmatpush.msra.mxu0 %v139
    %305 = vmatmul.f32.gmra.mxu0 %v287
    %v306 = vpop.f32.mrf.mxu0
    %v307 = vadd.f32 0.0, %v306
    %308 = vdwg.mxu0
    %v310 = vrot.slane %v307, 3
    %v312 = vadd.f32 %v136, %v310
    %v313 = vtanh.pop %v312
    %v315 = vrot.slane %v313, 5
    %317 = vmatpush.msra.mxu0 %v154
    %318 = vmatpush.msra.mxu0 %v153
    %319 = vmatpush.msra.mxu0 %v152
    %320 = vmatpush.msra.mxu0 %v151
    %321 = vmatpush.msra.mxu0 %v150
    %322 = vmatpush.msra.mxu0 %v149
    %323 = vmatpush.msra.mxu0 %v148
    %324 = vmatpush.msra.mxu0 %v147
    %325 = vmatpush.msra.mxu0 %v146
    %326 = vmatpush.msra.mxu0 %v145
    %327 = vmatpush.msra.mxu0 %v144
    %328 = vmatpush.msra.mxu0 %v143
    %329 = vmatpush.msra.mxu0 %v142
    %330 = vmatpush.msra.mxu0 %v141
    %331 = vmatpush.msra.mxu0 %v140
    %332 = vmatpush.msra.mxu0 %v139
    %333 = vmatmul.f32.gmra.mxu0 %v315
    %v334 = vpop.f32.mrf.mxu0
    %v335 = vadd.f32 0.0, %v334
    %336 = vdwg.mxu0
    %v338 = vrot.slane %v335, 2
    %v340 = vadd.f32 %v136, %v338
    %v341 = vtanh.pop %v340
    %v343 = vrot.slane %v341, 6
    %345 = vmatpush.msra.mxu0 %v154
    %346 = vmatpush.msra.mxu0 %v153
    %347 = vmatpush.msra.mxu0 %v152
    %348 = vmatpush.msra.mxu0 %v151
    %349 = vmatpush.msra.mxu0 %v150
    %350 = vmatpush.msra.mxu0 %v149
    %351 = vmatpush.msra.mxu0 %v148
    %352 = vmatpush.msra.mxu0 %v147
    %353 = vmatpush.msra.mxu0 %v146
    %354 = vmatpush.msra.mxu0 %v145
    %355 = vmatpush.msra.mxu0 %v144
    %356 = vmatpush.msra.mxu0 %v143
    %357 = vmatpush.msra.mxu0 %v142
    %358 = vmatpush.msra.mxu0 %v141
    %359 = vmatpush.msra.mxu0 %v140
    %360 = vmatpush.msra.mxu0 %v139
    %361 = vmatmul.f32.gmra.mxu0 %v343
    %v362 = vpop.f32.mrf.mxu0
    %v363 = vadd.f32 0.0, %v362
    %364 = vdwg.mxu0
    %v366 = vrot.slane %v363, 1
    %v368 = vadd.f32 %v136, %v366
    %v369 = vtanh.pop %v368
    %v370 = vld [vmem:[#allocation8] sm:$0xff]
    %v371 = vld [vmem:[#allocation8 + $0x8] sm:$0xff]
    %v372 = vld [vmem:[#allocation8 + $0x10] sm:$0xff]
    %v373 = vld [vmem:[#allocation8 + $0x18] sm:$0xff]
    %v374 = vld [vmem:[#allocation8 + $0x20] sm:$0xff]
    %v375 = vld [vmem:[#allocation8 + $0x28] sm:$0xff]
    %v376 = vld [vmem:[#allocation8 + $0x30] sm:$0xff]
    %v377 = vld [vmem:[#allocation8 + $0x38] sm:$0xff]
    %v378 = vld [vmem:[#allocation8 + $0x40] sm:$0xff]
    %v379 = vld [vmem:[#allocation8 + $0x48] sm:$0xff]
    %v380 = vld [vmem:[#allocation8 + $0x50] sm:$0xff]
    %v381 = vld [vmem:[#allocation8 + $0x58] sm:$0xff]
    %v382 = vld [vmem:[#allocation8 + $0x60] sm:$0xff]
    %v383 = vld [vmem:[#allocation8 + $0x68] sm:$0xff]
    %v384 = vld [vmem:[#allocation8 + $0x70] sm:$0xff]
    %v385 = vld [vmem:[#allocation8 + $0x78] sm:$0xff]
    %v386 = vld [vmem:[%s7] sm:$0x1]
    %v388 = vrot.slane %v369, 7
    %390 = vmatpush.msra.mxu0 %v385
    %391 = vmatpush.msra.mxu0 %v384
    %392 = vmatpush.msra.mxu0 %v383
    %393 = vmatpush.msra.mxu0 %v382
    %394 = vmatpush.msra.mxu0 %v381
    %395 = vmatpush.msra.mxu0 %v380
    %396 = vmatpush.msra.mxu0 %v379
    %397 = vmatpush.msra.mxu0 %v378
    %398 = vmatpush.msra.mxu0 %v377
    %399 = vmatpush.msra.mxu0 %v376
    %400 = vmatpush.msra.mxu0 %v375
    %401 = vmatpush.msra.mxu0 %v374
    %402 = vmatpush.msra.mxu0 %v373
    %403 = vmatpush.msra.mxu0 %v372
    %404 = vmatpush.msra.mxu0 %v371
    %405 = vmatpush.msra.mxu0 %v370
    %406 = vmatmul.f32.gmra.mxu0 %v388
    %v407 = vpop.f32.mrf.mxu0
    %v408 = vadd.f32 %v386, %v407
    %409 = vdwg.mxu0
    %v410 = vxor.u32 %v408, 2147483648
    %v411 = vmul.f32 %v410, 1.442695
    %v412 = vpow.pop %v411
    %v413 = vadd.f32 %v412, 1.0
    %v414 = vrcp.pop %v413
    %v415 = vmul.f32 %v413, %v414
    %v416 = vsub.f32 1.0, %v415
    %v417 = vmul.f32 %v414, %v416
    %v418 = vadd.f32 %v414, %v417
    %vm419 = vweird.f32 %v413
    %vm420 = vweird.f32 %v414
    %vm421 = vmor %vm419, %vm420
    %v422 = vsel %vm421, %v414, %v418
    %v423 = vand.u32 2147483647, %v413
    %vm424 = vcmp.eq.f32.partialorder %v423, 8.507059e+37
    %v425 = vand.u32 %v413, 2147483648
    %v426 = vor.u32 1.1754944e-38, %v425
    %v427 = vsel %vm424, %v426, %v422
    %v428 = vmul.f32 1.0, %v427
    %429 = vst [vmem:[#allocation10] sm:$0x1] %v428
    // Predicated region
    $region38: #{tpu_custom_call.1} parent=1 // pred_check
      _
    $region39: #{tpu_custom_call.1} parent=1 // pred_check_branch
      %431 = sbr.rel (0) target = $region41
    $region40: #{tpu_custom_call.1} parent=1 // pred_region
      %433 = vsyncadd [#allocation7], 0
      %s435 = sshll.u32 [#allocation10], 4
      %s436 = int_to_ptr.vmem [resolvable:$true] %s435
      %s437 = sshll.u32 %s8, 4
      %s438 = int_to_ptr.hbm [resolvable:$true] %s437
      %440 = dma.vmem_to_hbm [thread:$0]  %s436, 16, %s438, [#allocation7]
    $region41: #{tpu_custom_call.1} parent=1 // pred_fallthru
      _
    // Predicated region
    $region42: #{tpu_custom_call.1} parent=1 // pred_check
      _
    $region43: #{tpu_custom_call.1} parent=1 // pred_check_branch
      %442 = sbr.rel (0) target = $region45
    $region44: #{tpu_custom_call.1} parent=1 // pred_region
      %444 = dma.done [#allocation7], 16
    $region45: #{tpu_custom_call.1} parent=1 // pred_fallthru
      _
    %445 = vsyncpa [#allocation6], 1
    %446 = vsyncpa [#allocation9], 1
    %447 = vsyncpa [#allocation7], 1

</llo_original>
